<compile_context>
chip_gen: v7x
topology: tpu7x:2x2x1
jax: 0.10.0
libtpu: 0.0.40
codegen_flags: <defaults>
</compile_context>

<pallas_src>
import functools

import jax
import jax.numpy as jnp
from jax.experimental import pallas as pl
from jax.experimental.pallas import tpu as pltpu

LOG_STD_MAX = 2.0
LOG_STD_MIN = -5.0
# Folded affine: log_std = _LS_A + _LS_B * tanh(z)
_LS_B = 0.5 * (LOG_STD_MAX - LOG_STD_MIN)
_LS_A = LOG_STD_MIN + _LS_B

HIDDEN = 256          # fixed by the module (fc1/fc2 are 256-wide)
LANE = 128            # TPU lane width
MAX_BATCH_TILE = 256  # cap on rows per grid step


def _round_up(v, m):
    return ((v + m - 1) // m) * m


def _head_layout(act_dim):
    """Returns (out_w, split): packed single 128-lane slab if it fits."""
    if 2 * act_dim <= LANE:
        return LANE, act_dim                       # [mean | log_std | 0-pad] in one slab
    head_pad = _round_up(act_dim, LANE)            # fallback: [mean|pad | log_std|pad]
    return 2 * head_pad, head_pad


def _actor_kernel(x_ref, w1_ref, b1_ref, w2_ref, b2_ref, wh_ref, bh_ref, out_ref,
                  *, split, compute_dtype):
    cd = compute_dtype
    x = x_ref[...].astype(cd)                                              # (TB, obs)
    h1 = jnp.dot(x, w1_ref[...].astype(cd),
                 preferred_element_type=jnp.float32)                       # MXU
    h1 = jnp.maximum(h1 + b1_ref[...], 0.0)                                # bias+ReLU (VPU)
    h2 = jnp.dot(h1.astype(cd), w2_ref[...].astype(cd),
                 preferred_element_type=jnp.float32)
    h2 = jnp.maximum(h2 + b2_ref[...], 0.0)

    # Fused mean|log_std head: one lane-dense MXU matmul.
    head = jnp.dot(h2.astype(cd), wh_ref[...].astype(cd),
                   preferred_element_type=jnp.float32) + bh_ref[...]
    # Lane mask: columns >= split hold log_std -> apply folded tanh affine.
    col = jax.lax.broadcasted_iota(jnp.int32, head.shape, 1)
    out_ref[...] = jnp.where(col >= split,
                             _LS_A + _LS_B * jnp.tanh(head),               # tanh on EUP
                             head)                                          # single full-tile store


def prepare_actor_params(params):
    """One-time packing of raw Linear params into the kernel's fused layout.

    Returns (w1, b1_row, w2, b2_row, wh, bh). Do this once, outside the hot
    path, so the per-call HBM traffic is only what the kernel actually reads.
    """
    w1, b1, w2, b2, wm, bm, wl, bl = params
    act_dim = wm.shape[1]
    out_w, split = _head_layout(act_dim)

    wh = jnp.zeros((HIDDEN, out_w), jnp.float32)
    wh = wh.at[:, :act_dim].set(wm)
    wh = wh.at[:, split:split + act_dim].set(wl)
    bh = jnp.zeros((1, out_w), jnp.float32)
    bh = bh.at[0, :act_dim].set(bm)
    bh = bh.at[0, split:split + act_dim].set(bl)

    return (w1, b1.reshape(1, HIDDEN), w2, b2.reshape(1, HIDDEN), wh, bh)


@functools.partial(jax.jit, static_argnames=("act_dim", "use_bf16"))
def actor_forward(x, prepared, *, act_dim, use_bf16=False):
    """x: (B, obs_dim) float32 -> (mean, log_std), each (B, act_dim) float32."""
    w1, b1r, w2, b2r, wh, bh = prepared
    B, obs_dim = x.shape
    out_w, split = _head_layout(act_dim)
    assert wh.shape == (HIDDEN, out_w), "prepared params / act_dim mismatch"

    # --- Batch tiling: right-size the tile so padding waste stays bounded. ---
    if B <= MAX_BATCH_TILE:
        n_tiles = 1
    else:
        n_tiles = pl.cdiv(B, MAX_BATCH_TILE)
    # Give megacore (v7x) at least 2 tiles when there are >= 256 rows; the
    # extra ~0.35us step is noise on v5e/v6e.
    if B >= MAX_BATCH_TILE:
        n_tiles = max(n_tiles, 2)
    tile = max(8, _round_up(pl.cdiv(B, n_tiles), 8))
    B_pad = tile * n_tiles
    if B_pad != B:
        x = jnp.pad(x, ((0, B_pad - B), (0, 0)))

    full = lambda shape: pl.BlockSpec(shape, lambda i: (0, 0))  # weights resident across tiles

    compute_dtype = jnp.bfloat16 if use_bf16 else jnp.float32

    flops = 2 * B_pad * (obs_dim * HIDDEN + HIDDEN * HIDDEN + HIDDEN * out_w)
    bytes_accessed = 4 * (B_pad * obs_dim
                          + obs_dim * HIDDEN + HIDDEN
                          + HIDDEN * HIDDEN + HIDDEN
                          + HIDDEN * out_w + out_w
                          + B_pad * out_w)

    out = pl.pallas_call(
        functools.partial(_actor_kernel, split=split, compute_dtype=compute_dtype),
        out_shape=jax.ShapeDtypeStruct((B_pad, out_w), jnp.float32),
        grid_spec=pltpu.PrefetchScalarGridSpec(
            num_scalar_prefetch=0,
            grid=(n_tiles,),
            in_specs=[
                pl.BlockSpec((tile, obs_dim), lambda i: (i, 0)),   # x tile
                full((obs_dim, HIDDEN)), full((1, HIDDEN)),        # fc1
                full((HIDDEN, HIDDEN)), full((1, HIDDEN)),         # fc2
                full((HIDDEN, out_w)), full((1, out_w)),           # fused mean|logstd head
            ],
            out_specs=pl.BlockSpec((tile, out_w), lambda i: (i, 0)),
        ),
        compiler_params=pltpu.CompilerParams(
            dimension_semantics=("parallel",),   # batch tiles shard across cores on v7x
        ),
        cost_estimate=pl.CostEstimate(
            flops=flops,
            transcendentals=B_pad * out_w,
            bytes_accessed=bytes_accessed,
        ),
    )(x, w1, b1r, w2, b2r, wh, bh)

    mean = out[:B, :act_dim]
    log_std = out[:B, split:split + act_dim]
    return mean, log_std


def init_actor_params(key, obs_dim, act_dim):
    """Deterministic init mimicking nn.Linear's U(-1/sqrt(fan_in), 1/sqrt(fan_in))."""
    def linear(k, fan_in, fan_out):
        kw, kb = jax.random.split(k)
        bound = 1.0 / jnp.sqrt(jnp.float32(fan_in))
        w = jax.random.uniform(kw, (fan_in, fan_out), jnp.float32, -bound, bound)
        b = jax.random.uniform(kb, (fan_out,), jnp.float32, -bound, bound)
        return w, b

    k1, k2, k3, k4 = jax.random.split(key, 4)
    w1, b1 = linear(k1, obs_dim, HIDDEN)
    w2, b2 = linear(k2, HIDDEN, HIDDEN)
    wm, bm = linear(k3, HIDDEN, act_dim)
    wl, bl = linear(k4, HIDDEN, act_dim)
    return (w1, b1, w2, b2, wm, bm, wl, bl)


def actor_forward_ref(x, params):
    """Plain-JAX reference for correctness checking."""
    w1, b1, w2, b2, wm, bm, wl, bl = params
    h1 = jax.nn.relu(x @ w1 + b1)
    h2 = jax.nn.relu(h1 @ w2 + b2)
    mean = h2 @ wm + bm
    log_std = jnp.tanh(h2 @ wl + bl)
    log_std = LOG_STD_MIN + 0.5 * (LOG_STD_MAX - LOG_STD_MIN) * (log_std + 1.0)
    return mean, log_std


def _check(batch, obs_dim, act_dim, key):
    k_param, k_x = jax.random.split(key)
    params = init_actor_params(k_param, obs_dim, act_dim)
    prepared = jax.block_until_ready(prepare_actor_params(params))  # one-time packing
    x = jax.random.normal(k_x, (batch, obs_dim), jnp.float32)

    mean, log_std = actor_forward(x, prepared, act_dim=act_dim)
    jax.block_until_ready((mean, log_std))

    mean_ref, log_std_ref = actor_forward_ref(x, params)
    assert mean.shape == (batch, act_dim) and log_std.shape == (batch, act_dim)
    assert jnp.allclose(mean, mean_ref, atol=1e-5, rtol=1e-5)
    assert jnp.allclose(log_std, log_std_ref, atol=1e-5, rtol=1e-5)
    # log_std must lie within [LOG_STD_MIN, LOG_STD_MAX] by construction
    assert bool(jnp.all(log_std >= LOG_STD_MIN)) and bool(jnp.all(log_std <= LOG_STD_MAX))


if __name__ == "__main__":
    key = jax.random.PRNGKey(0)
    k_small, k_big = jax.random.split(key)

    # Small inference-style batch (single grid step, packed 128-lane head).
    _check(batch=2, obs_dim=16, act_dim=8, key=k_small)
    # Larger, non-multiple batch (multi-tile, right-sized padding: 300 -> 304).
    _check(batch=300, obs_dim=16, act_dim=8, key=k_big)

    # TODO(synk): get_action's Normal.rsample / log_prob sampling path is stochastic host-side
    # glue in the original module and is not part of the forward hot path implemented here.
    # The optional bf16 matmul path (use_bf16=True) trades ~1e-2 relative error for ~4x MXU
    # throughput on v6e/v7x and is intentionally not exercised by the f32 tolerance check.

    print("KERNEL_OK")
</pallas_src>

<mosaic_0001>
module attributes {stable_mosaic.version = 11 : i64} {
  func.func @_actor_kernel(%arg0: i32, %arg1: memref<8x16xf32, #tpu.memory_space<vmem>>, %arg2: memref<16x256xf32, #tpu.memory_space<vmem>>, %arg3: memref<1x256xf32, #tpu.memory_space<vmem>>, %arg4: memref<256x256xf32, #tpu.memory_space<vmem>>, %arg5: memref<1x256xf32, #tpu.memory_space<vmem>>, %arg6: memref<256x128xf32, #tpu.memory_space<vmem>>, %arg7: memref<1x128xf32, #tpu.memory_space<vmem>>, %arg8: memref<8x128xf32, #tpu.memory_space<vmem>>) attributes {dimension_semantics = [#tpu.dimension_semantics<parallel>], iteration_bounds = array<i64: 1>, scalar_prefetch = 0 : i64, scratch_operands = 0 : i64, tpu.core_type = #tpu.core_type<tc>, window_params = [{transform_indices = @transform_0, window_bounds = array<i64: 8, 16>}, {pipeline_mode = #tpu.pipeline_mode<synchronous>, transform_indices = @transform_1, window_bounds = array<i64: 16, 256>}, {pipeline_mode = #tpu.pipeline_mode<synchronous>, transform_indices = @transform_2, window_bounds = array<i64: 1, 256>}, {pipeline_mode = #tpu.pipeline_mode<synchronous>, transform_indices = @transform_3, window_bounds = array<i64: 256, 256>}, {pipeline_mode = #tpu.pipeline_mode<synchronous>, transform_indices = @transform_4, window_bounds = array<i64: 1, 256>}, {pipeline_mode = #tpu.pipeline_mode<synchronous>, transform_indices = @transform_5, window_bounds = array<i64: 256, 128>}, {pipeline_mode = #tpu.pipeline_mode<synchronous>, transform_indices = @transform_6, window_bounds = array<i64: 1, 128>}, {transform_indices = @transform_7, window_bounds = array<i64: 8, 128>}]} {
    %c0 = arith.constant 0 : index
    %c0_0 = arith.constant 0 : index
    %0 = vector.load %arg1[%c0, %c0_0] : memref<8x16xf32, #tpu.memory_space<vmem>>, vector<8x16xf32>
    %c0_1 = arith.constant 0 : index
    %c0_2 = arith.constant 0 : index
    %1 = vector.load %arg2[%c0_1, %c0_2] : memref<16x256xf32, #tpu.memory_space<vmem>>, vector<16x256xf32>
    %cst = arith.constant dense<0.000000e+00> : vector<8x256xf32>
    %2 = tpu.matmul %0, %1, %cst {dimension_numbers = #tpu.dot_dimension_numbers<[1], [0], [0], [1], [0, 0, 1, 1], [], []>} : vector<8x16xf32>, vector<16x256xf32>, vector<8x256xf32> -> vector<8x256xf32>
    %c0_3 = arith.constant 0 : index
    %c0_4 = arith.constant 0 : index
    %3 = vector.load %arg3[%c0_3, %c0_4] : memref<1x256xf32, #tpu.memory_space<vmem>>, vector<1x256xf32>
    %4 = vector.broadcast %3 : vector<1x256xf32> to vector<8x256xf32>
    %5 = arith.addf %2, %4 : vector<8x256xf32>
    %cst_5 = arith.constant 0.000000e+00 : f32
    %6 = vector.broadcast %cst_5 : f32 to vector<8x256xf32>
    %7 = arith.maximumf %5, %6 : vector<8x256xf32>
    %c0_6 = arith.constant 0 : index
    %c0_7 = arith.constant 0 : index
    %8 = vector.load %arg4[%c0_6, %c0_7] : memref<256x256xf32, #tpu.memory_space<vmem>>, vector<256x256xf32>
    %cst_8 = arith.constant dense<0.000000e+00> : vector<8x256xf32>
    %9 = tpu.matmul %7, %8, %cst_8 {dimension_numbers = #tpu.dot_dimension_numbers<[1], [0], [0], [1], [0, 0, 1, 1], [], []>} : vector<8x256xf32>, vector<256x256xf32>, vector<8x256xf32> -> vector<8x256xf32>
    %c0_9 = arith.constant 0 : index
    %c0_10 = arith.constant 0 : index
    %10 = vector.load %arg5[%c0_9, %c0_10] : memref<1x256xf32, #tpu.memory_space<vmem>>, vector<1x256xf32>
    %11 = vector.broadcast %10 : vector<1x256xf32> to vector<8x256xf32>
    %12 = arith.addf %9, %11 : vector<8x256xf32>
    %cst_11 = arith.constant 0.000000e+00 : f32
    %13 = vector.broadcast %cst_11 : f32 to vector<8x256xf32>
    %14 = arith.maximumf %12, %13 : vector<8x256xf32>
    %c0_12 = arith.constant 0 : index
    %c0_13 = arith.constant 0 : index
    %15 = vector.load %arg6[%c0_12, %c0_13] : memref<256x128xf32, #tpu.memory_space<vmem>>, vector<256x128xf32>
    %cst_14 = arith.constant dense<0.000000e+00> : vector<8x128xf32>
    %16 = tpu.matmul %14, %15, %cst_14 {dimension_numbers = #tpu.dot_dimension_numbers<[1], [0], [0], [1], [0, 0, 1, 1], [], []>} : vector<8x256xf32>, vector<256x128xf32>, vector<8x128xf32> -> vector<8x128xf32>
    %c0_15 = arith.constant 0 : index
    %c0_16 = arith.constant 0 : index
    %17 = vector.load %arg7[%c0_15, %c0_16] : memref<1x128xf32, #tpu.memory_space<vmem>>, vector<1x128xf32>
    %18 = vector.broadcast %17 : vector<1x128xf32> to vector<8x128xf32>
    %19 = arith.addf %16, %18 : vector<8x128xf32>
    %20 = tpu.iota {dimensions = array<i32: 1>} : vector<8x128xi32>
    %c8_i32 = arith.constant 8 : i32
    %21 = vector.broadcast %c8_i32 : i32 to vector<8x128xi32>
    %22 = arith.cmpi sge, %20, %21 : vector<8x128xi32>
    %23 = math.tanh %19 : vector<8x128xf32>
    %cst_17 = arith.constant 3.500000e+00 : f32
    %24 = vector.broadcast %cst_17 : f32 to vector<8x128xf32>
    %25 = arith.mulf %24, %23 : vector<8x128xf32>
    %cst_18 = arith.constant -1.500000e+00 : f32
    %26 = vector.broadcast %cst_18 : f32 to vector<8x128xf32>
    %27 = arith.addf %26, %25 : vector<8x128xf32>
    %28 = arith.select %22, %27, %19 : vector<8x128xi1>, vector<8x128xf32>
    %c0_19 = arith.constant 0 : index
    %c0_20 = arith.constant 0 : index
    %29 = vector.load %arg8[%c0_19, %c0_20] : memref<8x128xf32, #tpu.memory_space<vmem>>, vector<8x128xf32>
    tpu.vector_store %arg8[%c0_19, %c0_20], %28 {strides = array<i32>} : memref<8x128xf32, #tpu.memory_space<vmem>>, vector<8x128xf32>,
    return
  }
  func.func @transform_0(%arg0: i32) -> (i32, i32) {
    %c0_i32 = arith.constant 0 : i32
    %c0_i32_0 = arith.constant 0 : i32
    return %arg0, %c0_i32 : i32, i32
  }
  func.func @transform_1(%arg0: i32) -> (i32, i32) {
    %c0_i32 = arith.constant 0 : i32
    %c0_i32_0 = arith.constant 0 : i32
    %c0_i32_1 = arith.constant 0 : i32
    return %c0_i32, %c0_i32_0 : i32, i32
  }
  func.func @transform_2(%arg0: i32) -> (i32, i32) {
    %c0_i32 = arith.constant 0 : i32
    %c0_i32_0 = arith.constant 0 : i32
    %c0_i32_1 = arith.constant 0 : i32
    return %c0_i32, %c0_i32_0 : i32, i32
  }
  func.func @transform_3(%arg0: i32) -> (i32, i32) {
    %c0_i32 = arith.constant 0 : i32
    %c0_i32_0 = arith.constant 0 : i32
    %c0_i32_1 = arith.constant 0 : i32
    return %c0_i32, %c0_i32_0 : i32, i32
  }
  func.func @transform_4(%arg0: i32) -> (i32, i32) {
    %c0_i32 = arith.constant 0 : i32
    %c0_i32_0 = arith.constant 0 : i32
    %c0_i32_1 = arith.constant 0 : i32
    return %c0_i32, %c0_i32_0 : i32, i32
  }
  func.func @transform_5(%arg0: i32) -> (i32, i32) {
    %c0_i32 = arith.constant 0 : i32
    %c0_i32_0 = arith.constant 0 : i32
    %c0_i32_1 = arith.constant 0 : i32
    return %c0_i32, %c0_i32_0 : i32, i32
  }
  func.func @transform_6(%arg0: i32) -> (i32, i32) {
    %c0_i32 = arith.constant 0 : i32
    %c0_i32_0 = arith.constant 0 : i32
    %c0_i32_1 = arith.constant 0 : i32
    return %c0_i32, %c0_i32_0 : i32, i32
  }
  func.func @transform_7(%arg0: i32) -> (i32, i32) {
    %c0_i32 = arith.constant 0 : i32
    %c0_i32_0 = arith.constant 0 : i32
    return %arg0, %c0_i32 : i32, i32
  }
}

</mosaic_0001>

<llo_original>
// kernel: actor_forward.1
$region0: #{actor_forward.1}
  #allocation0 [shape = 'u32[]', space=smem, size = 0x4, offset = 0x4, fixed_abs, tag = 'smem constant byte address 0x4 - core index']
  #allocation1 [shape = 'u32[144,128]{1,0:T(1,128)}', space=vmem, size = 0x12000, scoped, tag = 'internal scratch']
  %s0 = inlined_call_operand.vmem [shape: f32[8,16], index: 0, kind: input, shape index: {}]
  %s1 = inlined_call_operand.hbm [shape: f32[16,256], index: 1, kind: input, shape index: {}]
  %s2 = inlined_call_operand.vmem [shape: f32[1,256], index: 2, kind: input, shape index: {}]
  %s3 = inlined_call_operand.hbm [shape: f32[256,256], index: 3, kind: input, shape index: {}]
  %s4 = inlined_call_operand.vmem [shape: f32[1,256], index: 4, kind: input, shape index: {}]
  %s5 = inlined_call_operand.hbm [shape: f32[256,128], index: 5, kind: input, shape index: {}]
  %s6 = inlined_call_operand.vmem [shape: f32[1,128], index: 6, kind: input, shape index: {}]
  %s7 = inlined_call_operand.vmem [shape: f32[8,128], index: 7, kind: output, shape index: {}]
  %s8 = sld [smem:[#allocation0]]
  $region50: #{actor_forward.1} parent=0
    _
  %s10 = ssub.s32 1, %s8
  %s11 = scalar_select 0, %s10, %s8
  $region1: #{actor_forward.1} parent=0
    #allocation2 [shape = 'u8[16384]{0}', space=vmem, size = 0x4000, scoped, tag = 'input window, operand 1, single buffered']
    #allocation3 [shape = 's32[1]{0}', space=sflag, size = 0x4, scoped, tag = 'scoped memory for actor_forward.1']
    #allocation4 [shape = 'u8[262144]{0}', space=vmem, size = 0x40000, scoped, tag = 'input window, operand 3, single buffered']
    #allocation5 [shape = 's32[1]{0}', space=sflag, size = 0x4, scoped, tag = 'scoped memory for actor_forward.1']
    #allocation6 [shape = 'u8[131072]{0}', space=vmem, size = 0x20000, scoped, tag = 'input window, operand 5, single buffered']
    %12 = vsyncpa [#allocation3], 0
    %13 = vsyncpa [#allocation5], 0
    // Predicated region
    $region2: #{actor_forward.1} parent=1 // pred_check
      _
    $region3: #{actor_forward.1} parent=1 // pred_check_branch
      %15 = sbr.rel (0) target = $region5
    $region4: #{actor_forward.1} parent=1 // pred_region
      _
    $region5: #{actor_forward.1} parent=1 // pred_fallthru
      _
    // Predicated region
    $region6: #{actor_forward.1} parent=1 // pred_check
      _
    $region7: #{actor_forward.1} parent=1 // pred_check_branch
      %17 = sbr.rel (0) target = $region9
    $region8: #{actor_forward.1} parent=1 // pred_region
      %s19 = ssub.s32 512, 512
      %20 = vsyncadd [#allocation3], %s19
      %s21 = sshll.u32 [#allocation2], 4
      %s22 = int_to_ptr.vmem [resolvable:$true] %s21
      %27 = dma.hbm_to_vmem [thread:$0]  %s1, 512, %s22, [#allocation3], 256, 256, 16
    $region9: #{actor_forward.1} parent=1 // pred_fallthru
      _
    // Predicated region
    $region10: #{actor_forward.1} parent=1 // pred_check
      _
    $region11: #{actor_forward.1} parent=1 // pred_check_branch
      %29 = sbr.rel (0) target = $region13
    $region12: #{actor_forward.1} parent=1 // pred_region
      _
    $region13: #{actor_forward.1} parent=1 // pred_fallthru
      _
    // Predicated region
    $region14: #{actor_forward.1} parent=1 // pred_check
      _
    $region15: #{actor_forward.1} parent=1 // pred_check_branch
      %31 = sbr.rel (0) target = $region17
    $region16: #{actor_forward.1} parent=1 // pred_region
      %s33 = ssub.s32 8192, 8192
      %34 = vsyncadd [#allocation5], %s33
      %s35 = sshll.u32 [#allocation4], 4
      %s36 = int_to_ptr.vmem [resolvable:$true] %s35
      %41 = dma.hbm_to_vmem [thread:$0]  %s3, 8192, %s36, [#allocation5], 256, 256, 16
    $region17: #{actor_forward.1} parent=1 // pred_fallthru
      _
    // Predicated region
    $region18: #{actor_forward.1} parent=1 // pred_check
      _
    $region19: #{actor_forward.1} parent=1 // pred_check_branch
      %43 = sbr.rel (0) target = $region21
    $region20: #{actor_forward.1} parent=1 // pred_region
      _
    $region21: #{actor_forward.1} parent=1 // pred_fallthru
      _
    // Predicated region
    $region22: #{actor_forward.1} parent=1 // pred_check
      _
    $region23: #{actor_forward.1} parent=1 // pred_check_branch
      %45 = sbr.rel (0) target = $region25
    $region24: #{actor_forward.1} parent=1 // pred_region
      %s47 = ssub.s32 4096, 4096
      %48 = vsyncadd [#allocation5], %s47
      %s49 = sshll.u32 [#allocation6], 4
      %s50 = int_to_ptr.vmem [resolvable:$true] %s49
      %55 = dma.hbm_to_vmem [thread:$0]  %s5, 4096, %s50, [#allocation5], 128, 128, 8
    $region25: #{actor_forward.1} parent=1 // pred_fallthru
      _
    // Predicated region
    $region26: #{actor_forward.1} parent=1 // pred_check
      _
    $region27: #{actor_forward.1} parent=1 // pred_check_branch
      %57 = sbr.rel (0) target = $region29
    $region28: #{actor_forward.1} parent=1 // pred_region
      _
    $region29: #{actor_forward.1} parent=1 // pred_fallthru
      _
    // Predicated region
    $region30: #{actor_forward.1} parent=1 // pred_check
      _
    $region31: #{actor_forward.1} parent=1 // pred_check_branch
      %59 = sbr.rel (0) target = $region33
    $region32: #{actor_forward.1} parent=1 // pred_region
      %60 = dma.done [#allocation3], 512
    $region33: #{actor_forward.1} parent=1 // pred_fallthru
      _
    // Predicated region
    $region34: #{actor_forward.1} parent=1 // pred_check
      _
    $region35: #{actor_forward.1} parent=1 // pred_check_branch
      %62 = sbr.rel (0) target = $region37
    $region36: #{actor_forward.1} parent=1 // pred_region
      %63 = dma.done [#allocation5], 8192
    $region37: #{actor_forward.1} parent=1 // pred_fallthru
      _
    // Predicated region
    $region38: #{actor_forward.1} parent=1 // pred_check
      _
    $region39: #{actor_forward.1} parent=1 // pred_check_branch
      %65 = sbr.rel (0) target = $region41
    $region40: #{actor_forward.1} parent=1 // pred_region
      %66 = dma.done [#allocation5], 4096
    $region41: #{actor_forward.1} parent=1 // pred_fallthru
      _
    %v67 = vld [vmem:[%s0] sm:$0xff]
    %v68 = vld [vmem:[#allocation2] sm:$0xff]
    %v69 = vld [vmem:[#allocation2 + $0x8] sm:$0xff]
    %v70 = vld [vmem:[#allocation2 + $0x10] sm:$0xff]
    %v71 = vld [vmem:[#allocation2 + $0x18] sm:$0xff]
    %v72 = vld [vmem:[%s2] sm:$0x3]
    %v74 = vlaneseq
    %v75 = vshrl.u32 %v74, 7
    %v76 = vsub.s32 0, %v75
    %v77 = vrot.slane %v72, %v76
    %v78 = vlaneseq
    %v79 = vshrl.u32 %v78, 7
    %v80 = vsub.s32 1, %v79
    %v81 = vrot.slane %v72, %v80
    %vm84 = vcmask 130048
    %v86 = vsel %vm84, %v67, 0
    %88 = vmatprep.subr.mxu0 %v69
    %89 = vmatpush1.msra.mxu0 %v68
    %90 = vmatprep.subr.mxu0 %v71
    %91 = vmatpush1.msra.mxu0 %v70
    %92 = vmatprep.subr.mxu0 0.0
    %93 = vmatpush1.msra.mxu0 0.0
    %94 = vmatprep.subr.mxu0 0.0
    %95 = vmatpush1.msra.mxu0 0.0
    %96 = vmatprep.subr.mxu0 0.0
    %97 = vmatpush1.msra.mxu0 0.0
    %98 = vmatprep.subr.mxu0 0.0
    %99 = vmatpush1.msra.mxu0 0.0
    %100 = vmatprep.subr.mxu0 0.0
    %101 = vmatpush1.msra.mxu0 0.0
    %102 = vmatprep.subr.mxu0 0.0
    %103 = vmatpush1.msra.mxu0 0.0
    %104 = vmatprep.subr.mxu0 0.0
    %105 = vmatpush1.msra.mxu0 0.0
    %106 = vmatprep.subr.mxu0 0.0
    %107 = vmatpush1.msra.mxu0 0.0
    %108 = vmatprep.subr.mxu0 0.0
    %109 = vmatpush1.msra.mxu0 0.0
    %110 = vmatprep.subr.mxu0 0.0
    %111 = vmatpush1.msra.mxu0 0.0
    %112 = vmatprep.subr.mxu0 0.0
    %113 = vmatpush1.msra.mxu0 0.0
    %114 = vmatprep.subr.mxu0 0.0
    %115 = vmatpush1.msra.mxu0 0.0
    %116 = vmatprep.subr.mxu0 0.0
    %117 = vmatpush1.msra.mxu0 0.0
    %118 = vmatprep.subr.mxu0 0.0
    %119 = vmatpush1.msra.mxu0 0.0
    %120 = vmatprep.subr.mxu0 0.0
    %121 = vmatpush1.msra.mxu0 0.0
    %122 = vmatprep.subr.mxu0 0.0
    %123 = vmatpush1.msra.mxu0 0.0
    %124 = vmatprep.subr.mxu0 0.0
    %125 = vmatpush1.msra.mxu0 0.0
    %126 = vmatprep.subr.mxu0 0.0
    %127 = vmatpush1.msra.mxu0 0.0
    %128 = vmatprep.subr.mxu0 0.0
    %129 = vmatpush1.msra.mxu0 0.0
    %130 = vmatprep.subr.mxu0 0.0
    %131 = vmatpush1.msra.mxu0 0.0
    %132 = vmatprep.subr.mxu0 0.0
    %133 = vmatpush1.msra.mxu0 0.0
    %134 = vmatprep.subr.mxu0 0.0
    %135 = vmatpush1.msra.mxu0 0.0
    %136 = vmatprep.subr.mxu0 0.0
    %137 = vmatpush1.msra.mxu0 0.0
    %138 = vmatprep.subr.mxu0 0.0
    %139 = vmatpush1.msra.mxu0 0.0
    %140 = vmatprep.subr.mxu0 0.0
    %141 = vmatpush1.msra.mxu0 0.0
    %142 = vmatprep.subr.mxu0 0.0
    %143 = vmatpush1.msra.mxu0 0.0
    %144 = vmatprep.subr.mxu0 0.0
    %145 = vmatpush1.msra.mxu0 0.0
    %146 = vmatprep.subr.mxu0 0.0
    %147 = vmatpush1.msra.mxu0 0.0
    %148 = vmatprep.subr.mxu0 0.0
    %149 = vmatpush1.msra.mxu0 0.0
    %150 = vmatprep.subr.mxu0 0.0
    %151 = vmatpush1.msra.mxu0 0.0
    %152 = vmatprep.mubr.f32.mxu0 0.0
    %153 = vmatmul.mubr.f32.gmra.mrb[0].mxu0 %v86
    %v154 = vpop.f32.mrb[0].mxu0
    %v155 = vadd.f32 %v77, %v154
    %v156 = vpop.f32.mrb[0].mxu0
    %v157 = vadd.f32 %v81, %v156
    %158 = vdwg.mxu0
    %v159 = vmax.f32 %v155, 0.0
    %v160 = vmax.f32 %v157, 0.0
    %v161 = vld [vmem:[#allocation4] sm:$0xff]
    %v162 = vld [vmem:[#allocation4 + $0x8] sm:$0xff]
    %v163 = vld [vmem:[#allocation4 + $0x10] sm:$0xff]
    %v164 = vld [vmem:[#allocation4 + $0x18] sm:$0xff]
    %v165 = vld [vmem:[#allocation4 + $0x20] sm:$0xff]
    %v166 = vld [vmem:[#allocation4 + $0x28] sm:$0xff]
    %v167 = vld [vmem:[#allocation4 + $0x30] sm:$0xff]
    %v168 = vld [vmem:[#allocation4 + $0x38] sm:$0xff]
    %v169 = vld [vmem:[#allocation4 + $0x40] sm:$0xff]
    %v170 = vld [vmem:[#allocation4 + $0x48] sm:$0xff]
    %v171 = vld [vmem:[#allocation4 + $0x50] sm:$0xff]
    %v172 = vld [vmem:[#allocation4 + $0x58] sm:$0xff]
    %v173 = vld [vmem:[#allocation4 + $0x60] sm:$0xff]
    %v174 = vld [vmem:[#allocation4 + $0x68] sm:$0xff]
    %v175 = vld [vmem:[#allocation4 + $0x70] sm:$0xff]
    %v176 = vld [vmem:[#allocation4 + $0x78] sm:$0xff]
    %v177 = vld [vmem:[#allocation4 + $0x80] sm:$0xff]
    %v178 = vld [vmem:[#allocation4 + $0x88] sm:$0xff]
    %v179 = vld [vmem:[#allocation4 + $0x90] sm:$0xff]
    %v180 = vld [vmem:[#allocation4 + $0x98] sm:$0xff]
    %v181 = vld [vmem:[#allocation4 + $0xa0] sm:$0xff]
    %v182 = vld [vmem:[#allocation4 + $0xa8] sm:$0xff]
    %v183 = vld [vmem:[#allocation4 + $0xb0] sm:$0xff]
    %v184 = vld [vmem:[#allocation4 + $0xb8] sm:$0xff]
    %v185 = vld [vmem:[#allocation4 + $0xc0] sm:$0xff]
    %v186 = vld [vmem:[#allocation4 + $0xc8] sm:$0xff]
    %v187 = vld [vmem:[#allocation4 + $0xd0] sm:$0xff]
    %v188 = vld [vmem:[#allocation4 + $0xd8] sm:$0xff]
    %v189 = vld [vmem:[#allocation4 + $0xe0] sm:$0xff]
    %v190 = vld [vmem:[#allocation4 + $0xe8] sm:$0xff]
    %v191 = vld [vmem:[#allocation4 + $0xf0] sm:$0xff]
    %v192 = vld [vmem:[#allocation4 + $0xf8] sm:$0xff]
    %v193 = vld [vmem:[#allocation4 + $0x100] sm:$0xff]
    %v194 = vld [vmem:[#allocation4 + $0x108] sm:$0xff]
    %v195 = vld [vmem:[#allocation4 + $0x110] sm:$0xff]
    %v196 = vld [vmem:[#allocation4 + $0x118] sm:$0xff]
    %v197 = vld [vmem:[#allocation4 + $0x120] sm:$0xff]
    %v198 = vld [vmem:[#allocation4 + $0x128] sm:$0xff]
    %v199 = vld [vmem:[#allocation4 + $0x130] sm:$0xff]
    %v200 = vld [vmem:[#allocation4 + $0x138] sm:$0xff]
    %v201 = vld [vmem:[#allocation4 + $0x140] sm:$0xff]
    %v202 = vld [vmem:[#allocation4 + $0x148] sm:$0xff]
    %v203 = vld [vmem:[#allocation4 + $0x150] sm:$0xff]
    %v204 = vld [vmem:[#allocation4 + $0x158] sm:$0xff]
    %v205 = vld [vmem:[#allocation4 + $0x160] sm:$0xff]
    %v206 = vld [vmem:[#allocation4 + $0x168] sm:$0xff]
    %v207 = vld [vmem:[#allocation4 + $0x170] sm:$0xff]
    %v208 = vld [vmem:[#allocation4 + $0x178] sm:$0xff]
    %v209 = vld [vmem:[#allocation4 + $0x180] sm:$0xff]
    %v210 = vld [vmem:[#allocation4 + $0x188] sm:$0xff]
    %v211 = vld [vmem:[#allocation4 + $0x190] sm:$0xff]
    %v212 = vld [vmem:[#allocation4 + $0x198] sm:$0xff]
    %v213 = vld [vmem:[#allocation4 + $0x1a0] sm:$0xff]
    %v214 = vld [vmem:[#allocation4 + $0x1a8] sm:$0xff]
    %v215 = vld [vmem:[#allocation4 + $0x1b0] sm:$0xff]
    %v216 = vld [vmem:[#allocation4 + $0x1b8] sm:$0xff]
    %v217 = vld [vmem:[#allocation4 + $0x1c0] sm:$0xff]
    %v218 = vld [vmem:[#allocation4 + $0x1c8] sm:$0xff]
    %v219 = vld [vmem:[#allocation4 + $0x1d0] sm:$0xff]
    %v220 = vld [vmem:[#allocation4 + $0x1d8] sm:$0xff]
    %v221 = vld [vmem:[#allocation4 + $0x1e0] sm:$0xff]
    %v222 = vld [vmem:[#allocation4 + $0x1e8] sm:$0xff]
    %v223 = vld [vmem:[#allocation4 + $0x1f0] sm:$0xff]
    %v224 = vld [vmem:[#allocation4 + $0x1f8] sm:$0xff]
    %v225 = vld [vmem:[%s4] sm:$0x3]
    %v227 = vlaneseq
    %v228 = vshrl.u32 %v227, 7
    %v229 = vsub.s32 0, %v228
    %v230 = vrot.slane %v225, %v229
    %v231 = vlaneseq
    %v232 = vshrl.u32 %v231, 7
    %v233 = vsub.s32 1, %v232
    %v234 = vrot.slane %v225, %v233
    %237 = vmatprep.subr.mxu0 %v162
    %238 = vmatpush1.msra.mxu0 %v161
    %239 = vmatprep.subr.mxu0 %v164
    %240 = vmatpush1.msra.mxu0 %v163
    %241 = vmatprep.subr.mxu0 %v166
    %242 = vmatpush1.msra.mxu0 %v165
    %243 = vmatprep.subr.mxu0 %v168
    %244 = vmatpush1.msra.mxu0 %v167
    %245 = vmatprep.subr.mxu0 %v170
    %246 = vmatpush1.msra.mxu0 %v169
    %247 = vmatprep.subr.mxu0 %v172
    %248 = vmatpush1.msra.mxu0 %v171
    %249 = vmatprep.subr.mxu0 %v174
    %250 = vmatpush1.msra.mxu0 %v173
    %251 = vmatprep.subr.mxu0 %v176
    %252 = vmatpush1.msra.mxu0 %v175
    %253 = vmatprep.subr.mxu0 %v178
    %254 = vmatpush1.msra.mxu0 %v177
    %255 = vmatprep.subr.mxu0 %v180
    %256 = vmatpush1.msra.mxu0 %v179
    %257 = vmatprep.subr.mxu0 %v182
    %258 = vmatpush1.msra.mxu0 %v181
    %259 = vmatprep.subr.mxu0 %v184
    %260 = vmatpush1.msra.mxu0 %v183
    %261 = vmatprep.subr.mxu0 %v186
    %262 = vmatpush1.msra.mxu0 %v185
    %263 = vmatprep.subr.mxu0 %v188
    %264 = vmatpush1.msra.mxu0 %v187
    %265 = vmatprep.subr.mxu0 %v190
    %266 = vmatpush1.msra.mxu0 %v189
    %267 = vmatprep.subr.mxu0 %v192
    %268 = vmatpush1.msra.mxu0 %v191
    %269 = vmatprep.subr.mxu0 %v194
    %270 = vmatpush1.msra.mxu0 %v193
    %271 = vmatprep.subr.mxu0 %v196
    %272 = vmatpush1.msra.mxu0 %v195
    %273 = vmatprep.subr.mxu0 %v198
    %274 = vmatpush1.msra.mxu0 %v197
    %275 = vmatprep.subr.mxu0 %v200
    %276 = vmatpush1.msra.mxu0 %v199
    %277 = vmatprep.subr.mxu0 %v202
    %278 = vmatpush1.msra.mxu0 %v201
    %279 = vmatprep.subr.mxu0 %v204
    %280 = vmatpush1.msra.mxu0 %v203
    %281 = vmatprep.subr.mxu0 %v206
    %282 = vmatpush1.msra.mxu0 %v205
    %283 = vmatprep.subr.mxu0 %v208
    %284 = vmatpush1.msra.mxu0 %v207
    %285 = vmatprep.subr.mxu0 %v210
    %286 = vmatpush1.msra.mxu0 %v209
    %287 = vmatprep.subr.mxu0 %v212
    %288 = vmatpush1.msra.mxu0 %v211
    %289 = vmatprep.subr.mxu0 %v214
    %290 = vmatpush1.msra.mxu0 %v213
    %291 = vmatprep.subr.mxu0 %v216
    %292 = vmatpush1.msra.mxu0 %v215
    %293 = vmatprep.subr.mxu0 %v218
    %294 = vmatpush1.msra.mxu0 %v217
    %295 = vmatprep.subr.mxu0 %v220
    %296 = vmatpush1.msra.mxu0 %v219
    %297 = vmatprep.subr.mxu0 %v222
    %298 = vmatpush1.msra.mxu0 %v221
    %299 = vmatprep.subr.mxu0 %v224
    %300 = vmatpush1.msra.mxu0 %v223
    %301 = vmatprep.mubr.f32.mxu0 %v160
    %302 = vmatmul.mubr.f32.gmra.mrb[0].mxu0 %v159
    %v303 = vpop.f32.mrb[0].mxu0
    %v304 = vadd.f32 %v230, %v303
    %v305 = vpop.f32.mrb[0].mxu0
    %v306 = vadd.f32 %v234, %v305
    %307 = vdwg.mxu0
    %v308 = vmax.f32 %v304, 0.0
    %v309 = vmax.f32 %v306, 0.0
    %v310 = vld [vmem:[#allocation6] sm:$0xff]
    %v311 = vld [vmem:[#allocation6 + $0x8] sm:$0xff]
    %v312 = vld [vmem:[#allocation6 + $0x10] sm:$0xff]
    %v313 = vld [vmem:[#allocation6 + $0x18] sm:$0xff]
    %v314 = vld [vmem:[#allocation6 + $0x20] sm:$0xff]
    %v315 = vld [vmem:[#allocation6 + $0x28] sm:$0xff]
    %v316 = vld [vmem:[#allocation6 + $0x30] sm:$0xff]
    %v317 = vld [vmem:[#allocation6 + $0x38] sm:$0xff]
    %v318 = vld [vmem:[#allocation6 + $0x40] sm:$0xff]
    %v319 = vld [vmem:[#allocation6 + $0x48] sm:$0xff]
    %v320 = vld [vmem:[#allocation6 + $0x50] sm:$0xff]
    %v321 = vld [vmem:[#allocation6 + $0x58] sm:$0xff]
    %v322 = vld [vmem:[#allocation6 + $0x60] sm:$0xff]
    %v323 = vld [vmem:[#allocation6 + $0x68] sm:$0xff]
    %v324 = vld [vmem:[#allocation6 + $0x70] sm:$0xff]
    %v325 = vld [vmem:[#allocation6 + $0x78] sm:$0xff]
    %v326 = vld [vmem:[#allocation6 + $0x80] sm:$0xff]
    %v327 = vld [vmem:[#allocation6 + $0x88] sm:$0xff]
    %v328 = vld [vmem:[#allocation6 + $0x90] sm:$0xff]
    %v329 = vld [vmem:[#allocation6 + $0x98] sm:$0xff]
    %v330 = vld [vmem:[#allocation6 + $0xa0] sm:$0xff]
    %v331 = vld [vmem:[#allocation6 + $0xa8] sm:$0xff]
    %v332 = vld [vmem:[#allocation6 + $0xb0] sm:$0xff]
    %v333 = vld [vmem:[#allocation6 + $0xb8] sm:$0xff]
    %v334 = vld [vmem:[#allocation6 + $0xc0] sm:$0xff]
    %v335 = vld [vmem:[#allocation6 + $0xc8] sm:$0xff]
    %v336 = vld [vmem:[#allocation6 + $0xd0] sm:$0xff]
    %v337 = vld [vmem:[#allocation6 + $0xd8] sm:$0xff]
    %v338 = vld [vmem:[#allocation6 + $0xe0] sm:$0xff]
    %v339 = vld [vmem:[#allocation6 + $0xe8] sm:$0xff]
    %v340 = vld [vmem:[#allocation6 + $0xf0] sm:$0xff]
    %v341 = vld [vmem:[#allocation6 + $0xf8] sm:$0xff]
    %v342 = vld [vmem:[%s6] sm:$0x1]
    %v344 = vlaneseq
    %v345 = vshrl.u32 %v344, 7
    %v346 = vsub.s32 0, %v345
    %v347 = vrot.slane %v342, %v346
    %349 = vmatprep.subr.mxu0 0.0
    %350 = vmatpush1.msra.mxu0 %v310
    %351 = vmatprep.subr.mxu0 0.0
    %352 = vmatpush1.msra.mxu0 %v311
    %353 = vmatprep.subr.mxu0 0.0
    %354 = vmatpush1.msra.mxu0 %v312
    %355 = vmatprep.subr.mxu0 0.0
    %356 = vmatpush1.msra.mxu0 %v313
    %357 = vmatprep.subr.mxu0 0.0
    %358 = vmatpush1.msra.mxu0 %v314
    %359 = vmatprep.subr.mxu0 0.0
    %360 = vmatpush1.msra.mxu0 %v315
    %361 = vmatprep.subr.mxu0 0.0
    %362 = vmatpush1.msra.mxu0 %v316
    %363 = vmatprep.subr.mxu0 0.0
    %364 = vmatpush1.msra.mxu0 %v317
    %365 = vmatprep.subr.mxu0 0.0
    %366 = vmatpush1.msra.mxu0 %v318
    %367 = vmatprep.subr.mxu0 0.0
    %368 = vmatpush1.msra.mxu0 %v319
    %369 = vmatprep.subr.mxu0 0.0
    %370 = vmatpush1.msra.mxu0 %v320
    %371 = vmatprep.subr.mxu0 0.0
    %372 = vmatpush1.msra.mxu0 %v321
    %373 = vmatprep.subr.mxu0 0.0
    %374 = vmatpush1.msra.mxu0 %v322
    %375 = vmatprep.subr.mxu0 0.0
    %376 = vmatpush1.msra.mxu0 %v323
    %377 = vmatprep.subr.mxu0 0.0
    %378 = vmatpush1.msra.mxu0 %v324
    %379 = vmatprep.subr.mxu0 0.0
    %380 = vmatpush1.msra.mxu0 %v325
    %381 = vmatprep.subr.mxu0 0.0
    %382 = vmatpush1.msra.mxu0 %v326
    %383 = vmatprep.subr.mxu0 0.0
    %384 = vmatpush1.msra.mxu0 %v327
    %385 = vmatprep.subr.mxu0 0.0
    %386 = vmatpush1.msra.mxu0 %v328
    %387 = vmatprep.subr.mxu0 0.0
    %388 = vmatpush1.msra.mxu0 %v329
    %389 = vmatprep.subr.mxu0 0.0
    %390 = vmatpush1.msra.mxu0 %v330
    %391 = vmatprep.subr.mxu0 0.0
    %392 = vmatpush1.msra.mxu0 %v331
    %393 = vmatprep.subr.mxu0 0.0
    %394 = vmatpush1.msra.mxu0 %v332
    %395 = vmatprep.subr.mxu0 0.0
    %396 = vmatpush1.msra.mxu0 %v333
    %397 = vmatprep.subr.mxu0 0.0
    %398 = vmatpush1.msra.mxu0 %v334
    %399 = vmatprep.subr.mxu0 0.0
    %400 = vmatpush1.msra.mxu0 %v335
    %401 = vmatprep.subr.mxu0 0.0
    %402 = vmatpush1.msra.mxu0 %v336
    %403 = vmatprep.subr.mxu0 0.0
    %404 = vmatpush1.msra.mxu0 %v337
    %405 = vmatprep.subr.mxu0 0.0
    %406 = vmatpush1.msra.mxu0 %v338
    %407 = vmatprep.subr.mxu0 0.0
    %408 = vmatpush1.msra.mxu0 %v339
    %409 = vmatprep.subr.mxu0 0.0
    %410 = vmatpush1.msra.mxu0 %v340
    %411 = vmatprep.subr.mxu0 0.0
    %412 = vmatpush1.msra.mxu0 %v341
    %413 = vmatprep.mubr.f32.mxu0 %v309
    %414 = vmatmul.mubr.f32.gmra.mrb[0].mxu0 %v308
    %v415 = vpop.f32.mrb[0].mxu0
    %v416 = vadd.f32 %v347, %v415
    %v417 = vpop.f32.mrb[0].mxu0
    %418 = vdwg.mxu0
    %v419 = vlaneseq
    %v420 = vand.u32 %v419, 127
    %vm421 = vcmp.ge.s32.totalorder %v420, 8
    %v422 = vtanh.pop %v416
    %v423 = vmul.f32 %v422, 3.5
    %v424 = vadd.f32 %v423, -1.5
    %v425 = vsel %vm421, %v424, %v416
    %426 = vst [vmem:[%s7] sm:$0xff] %v425
    // Predicated region
    $region42: #{actor_forward.1} parent=1 // pred_check
      _
    $region43: #{actor_forward.1} parent=1 // pred_check_branch
      %428 = sbr.rel (0) target = $region45
    $region44: #{actor_forward.1} parent=1 // pred_region
      _
    $region45: #{actor_forward.1} parent=1 // pred_fallthru
      _
    // Predicated region
    $region46: #{actor_forward.1} parent=1 // pred_check
      _
    $region47: #{actor_forward.1} parent=1 // pred_check_branch
      %430 = sbr.rel (0) target = $region49
    $region48: #{actor_forward.1} parent=1 // pred_region
      _
    $region49: #{actor_forward.1} parent=1 // pred_fallthru
      _
    %431 = vsyncpa [#allocation3], 1
    %432 = vsyncpa [#allocation5], 1

</llo_original>
